<compile_context>
chip_gen: v7x
topology: tpu7x:2x2x1
jax: 0.10.0
libtpu: 0.0.40
codegen_flags: <defaults>
</compile_context>

<pallas_src>
import functools

import jax
import jax.numpy as jnp
from jax.experimental import pallas as pl
from jax.experimental.pallas import tpu as pltpu

LANE = 128
TARGET_BLOCK_BYTES = 4 * 1024 * 1024      # ~4 MiB of input per grid block
VMEM_LIMIT_BYTES = 48 * 1024 * 1024       # explicit scoped-VMEM budget
SMALL_N_THRESHOLD = 1 << 20               # below this, pure-JAX fast path


def _round_up(x, m):
    return ((x + m - 1) // m) * m


def _num_tensorcores():
    """Best-effort count of TensorCores addressable by one pallas_call.

    Returns 2 on v7x-class chips (2 TCs per device), 1 otherwise; any doubt
    falls back to 1 so CORE_PARALLEL is never requested where it can't apply.
    """
    try:
        kind = jax.devices()[0].device_kind.lower()
    except Exception:
        return 1
    if "v7" in kind or "7x" in kind:
        return 2
    return 1


def _l1_partial_sum_kernel(p_ref, t_ref, o_ref, *, tiles_per_part, tile_rows,
                           m_rows, num_blocks, needs_mask):
    """Accumulate |pred - target| into a per-part (8, 128) f32 output block
    that stays resident across the inner ('arbitrary') grid axis."""
    part = pl.program_id(0)
    j = pl.program_id(1)

    @pl.when(j == 0)
    def _():
        o_ref[...] = jnp.zeros_like(o_ref)

    diff = jnp.abs(p_ref[...].astype(jnp.float32) - t_ref[...].astype(jnp.float32))

    def fold(x):
        # (tile_rows, 128) -> (8, 128): group sublanes in vreg-sized chunks and
        # add them with plain VPU adds; no cross-sublane XLU work per step.
        return x.reshape(tile_rows // 8, 8, LANE).sum(axis=0)

    if needs_mask:
        blk = part * tiles_per_part + j

        # Only the true last block (partial rows) and any clamped duplicate
        # blocks past it need masking; interior blocks skip it entirely.
        @pl.when(blk >= num_blocks - 1)
        def _():
            row_start = blk * tile_rows
            row_ids = row_start + jax.lax.broadcasted_iota(jnp.int32, diff.shape, 0)
            o_ref[...] += fold(jnp.where(row_ids < m_rows, diff, 0.0))

        @pl.when(blk < num_blocks - 1)
        def _():
            o_ref[...] += fold(diff)
    else:
        o_ref[...] += fold(diff)


def _l1_abs_sum_pallas(pred, target, block_rows=None):
    """sum(|pred - target|) in f32 for lane-aligned inputs (n % 128 == 0)."""
    assert pred.shape == target.shape
    n = pred.size
    assert n > 0 and n % LANE == 0

    m_rows = n // LANE
    # Free (layout-compatible) reshape of the flat view — no HBM copy.
    p2 = pred.reshape(m_rows, LANE)
    t2 = target.reshape(m_rows, LANE)

    # Dtype-aware block sizing: keep each input block ~TARGET_BLOCK_BYTES so the
    # per-step pipeline overhead stays small relative to the DMA, and keep row
    # counts a multiple of the packed-vreg sublane count.
    itemsize = max(pred.dtype.itemsize, target.dtype.itemsize)
    sub = max(8, 32 // itemsize)                     # 8 f32, 16 bf16, 32 int8
    rows_target = max(sub, (TARGET_BLOCK_BYTES // (LANE * itemsize)) // sub * sub)
    tile_rows = min(rows_target, _round_up(m_rows, sub))
    if block_rows is not None:                       # test/tuning override
        tile_rows = min(_round_up(block_rows, sub), _round_up(m_rows, sub))

    num_blocks = pl.cdiv(m_rows, tile_rows)

    cores = _num_tensorcores()
    if cores > 1 and num_blocks >= cores:
        parts = cores
        dim0_sem = pltpu.CORE_PARALLEL               # split across TCs on v7x
    else:
        parts = 1
        dim0_sem = pltpu.ARBITRARY

    tiles_per_part = pl.cdiv(num_blocks, parts)
    needs_mask = (parts * tiles_per_part * tile_rows) != m_rows

    def in_map(p, j):
        blk = p * tiles_per_part + j
        # Clamp duplicated trailing blocks into range; the in-kernel row mask
        # zeroes their contribution.
        return (jnp.minimum(blk, num_blocks - 1), 0)

    kernel = functools.partial(
        _l1_partial_sum_kernel,
        tiles_per_part=tiles_per_part,
        tile_rows=tile_rows,
        m_rows=m_rows,
        num_blocks=num_blocks,
        needs_mask=needs_mask,
    )

    cost = pl.CostEstimate(
        flops=3 * n,  # sub + abs + accumulate per element
        transcendentals=0,
        bytes_accessed=(n * pred.dtype.itemsize
                        + n * target.dtype.itemsize
                        + parts * 8 * LANE * 4),
    )

    partials = pl.pallas_call(
        kernel,
        out_shape=jax.ShapeDtypeStruct((parts * 8, LANE), jnp.float32),
        grid_spec=pltpu.PrefetchScalarGridSpec(
            num_scalar_prefetch=0,
            grid=(parts, tiles_per_part),
            in_specs=[
                # NOTE: pipeline_mode=pl.Buffered(3) is a candidate sweep on
                # v7x once measured; default double-buffering kept here.
                pl.BlockSpec((tile_rows, LANE), in_map),
                pl.BlockSpec((tile_rows, LANE), in_map),
            ],
            out_specs=pl.BlockSpec((8, LANE), lambda p, j: (p, 0)),
        ),
        compiler_params=pltpu.CompilerParams(
            dimension_semantics=(dim0_sem, pltpu.ARBITRARY),
            vmem_limit_bytes=VMEM_LIMIT_BYTES,
        ),
        cost_estimate=cost,
    )(p2, t2)

    # Single cheap cross-lane/sublane reduce of the (parts*8, 128) partials.
    return jnp.sum(partials)


def l1_loss_pallas(pred, target, weight=None, loss_weight=100.0,
                   reduction='mean', min_pallas_elems=SMALL_N_THRESHOLD,
                   block_rows=None):
    """L1Loss.forward with weight=None. reduction in {'mean', 'sum'}.

    Large, lane-aligned inputs stream through the Pallas reduction kernel;
    small (< min_pallas_elems) or non-128-multiple inputs use a pure-JAX path
    (strictly faster / avoids hidden prefix copies there).
    """
    assert pred.shape == target.shape
    if weight is not None:
        # TODO(synk): weight masking / sample_wise averaging not implemented;
        # default CircuitNet path uses weight=None.
        raise NotImplementedError("weight is not supported by this kernel")
    if reduction not in ('mean', 'sum'):
        # TODO(synk): reduction='none' (elementwise map) not implemented in
        # this scalar-reduction kernel.
        raise NotImplementedError("reduction='none' not implemented")

    n_elems = pred.size
    use_pallas = (n_elems >= max(1, min_pallas_elems)) and (n_elems % LANE == 0)
    if n_elems > 0 and (use_pallas or (min_pallas_elems == 0 and n_elems % LANE == 0)):
        total = _l1_abs_sum_pallas(pred, target, block_rows=block_rows)
    else:
        # Pure-JAX fast path / non-lane-aligned fallback.
        total = jnp.sum(jnp.abs(pred.astype(jnp.float32) - target.astype(jnp.float32)))

    if reduction == 'mean':
        loss = total / jnp.float32(max(n_elems, 1))
    else:  # 'sum'
        loss = total

    return jnp.float32(loss_weight) * loss


if __name__ == "__main__":
    key = jax.random.PRNGKey(0)
    k1, k2, k3, k4, k5, k6 = jax.random.split(key, 6)

    # 1) Small CircuitNet-like NCHW shape, forced through the Pallas kernel
    #    (n = 2048 is lane-aligned; single block, single part).
    pred = jax.random.normal(k1, (2, 4, 16, 16), dtype=jnp.float32)
    target = jax.random.normal(k2, (2, 4, 16, 16), dtype=jnp.float32)
    out = l1_loss_pallas(pred, target, min_pallas_elems=0)
    out = jax.block_until_ready(out)
    ref = 100.0 * jnp.mean(jnp.abs(pred - target))
    assert jnp.allclose(out, ref, rtol=1e-5, atol=1e-5), (out, ref)

    # reduction='sum' through the kernel.
    out_sum = jax.block_until_ready(
        l1_loss_pallas(pred, target, reduction='sum', min_pallas_elems=0))
    ref_sum = 100.0 * jnp.sum(jnp.abs(pred - target))
    assert jnp.allclose(out_sum, ref_sum, rtol=1e-5, atol=1e-3), (out_sum, ref_sum)

    # Default path (small-input pure-JAX fast path) gives the same answer.
    out_fast = jax.block_until_ready(l1_loss_pallas(pred, target))
    assert jnp.allclose(out_fast, ref, rtol=1e-5, atol=1e-5), (out_fast, ref)

    # 2) Lane-aligned shape driven with a tiny block override to exercise the
    #    multi-block grid, the partial-last-block mask and (on 2-TC chips) the
    #    clamped duplicate-block path.
    pred2 = jax.random.normal(k3, (2, 4, 20, 16), dtype=jnp.float32)
    target2 = jax.random.normal(k4, (2, 4, 20, 16), dtype=jnp.float32)
    out2 = l1_loss_pallas(pred2, target2, min_pallas_elems=0, block_rows=8)
    out2 = jax.block_until_ready(out2)
    ref2 = 100.0 * jnp.mean(jnp.abs(pred2 - target2))
    assert jnp.allclose(out2, ref2, rtol=1e-5, atol=1e-5), (out2, ref2)

    # 3) Non-lane-aligned shape -> documented pure-JAX fallback (no hidden
    #    prefix copy, still bit-correct vs. the reference).
    pred3 = jax.random.normal(k5, (2, 3, 33, 17), dtype=jnp.float32)
    target3 = jax.random.normal(k6, (2, 3, 33, 17), dtype=jnp.float32)
    out3 = jax.block_until_ready(l1_loss_pallas(pred3, target3))
    ref3 = 100.0 * jnp.mean(jnp.abs(pred3 - target3))
    assert jnp.allclose(out3, ref3, rtol=1e-5, atol=1e-5), (out3, ref3)

    print("KERNEL_OK")
</pallas_src>

<mosaic_0001>
module attributes {stable_mosaic.version = 11 : i64} {
  func.func @_l1_partial_sum_kernel(%arg0: i32, %arg1: i32, %arg2: memref<16x128xf32, #tpu.memory_space<vmem>>, %arg3: memref<16x128xf32, #tpu.memory_space<vmem>>, %arg4: memref<8x128xf32, #tpu.memory_space<vmem>>) attributes {dimension_semantics = [#tpu.dimension_semantics<arbitrary>, #tpu.dimension_semantics<arbitrary>], iteration_bounds = array<i64: 1, 1>, scalar_prefetch = 0 : i64, scratch_operands = 0 : i64, tpu.core_type = #tpu.core_type<tc>, window_params = [{transform_indices = @transform_0, window_bounds = array<i64: 16, 128>}, {transform_indices = @transform_1, window_bounds = array<i64: 16, 128>}, {transform_indices = @transform_2, window_bounds = array<i64: 8, 128>}]} {
    %c0_i32 = arith.constant 0 : i32
    %0 = arith.cmpi eq, %arg1, %c0_i32 : i32
    %1 = arith.extui %0 : i1 to i32
    %c0_i32_0 = arith.constant 0 : i32
    %2 = arith.cmpi ne, %1, %c0_i32_0 : i32
    scf.if %2 {
      %cst_8 = arith.constant 0.000000e+00 : f32
      %12 = vector.broadcast %cst_8 : f32 to vector<8x128xf32>
      %c0_9 = arith.constant 0 : index
      %c0_10 = arith.constant 0 : index
      %13 = vector.load %arg4[%c0_9, %c0_10] : memref<8x128xf32, #tpu.memory_space<vmem>>, vector<8x128xf32>
      tpu.vector_store %arg4[%c0_9, %c0_10], %12 {strides = array<i32>} : memref<8x128xf32, #tpu.memory_space<vmem>>, vector<8x128xf32>,
    } else {
    }
    %c0 = arith.constant 0 : index
    %c0_1 = arith.constant 0 : index
    %3 = vector.load %arg2[%c0, %c0_1] : memref<16x128xf32, #tpu.memory_space<vmem>>, vector<16x128xf32>
    %c0_2 = arith.constant 0 : index
    %c0_3 = arith.constant 0 : index
    %4 = vector.load %arg3[%c0_2, %c0_3] : memref<16x128xf32, #tpu.memory_space<vmem>>, vector<16x128xf32>
    %5 = arith.subf %3, %4 : vector<16x128xf32>
    %6 = math.absf %5 : vector<16x128xf32>
    %c0_4 = arith.constant 0 : index
    %c0_5 = arith.constant 0 : index
    %7 = vector.load %arg4[%c0_4, %c0_5] : memref<8x128xf32, #tpu.memory_space<vmem>>, vector<8x128xf32>
    %8 = vector.shape_cast %6 : vector<16x128xf32> to vector<2x8x128xf32>
    %cst = arith.constant dense<0.000000e+00> : vector<8x128xf32>
    %9 = vector.multi_reduction <add>, %8, %cst [0] : vector<2x8x128xf32> to vector<8x128xf32>
    %10 = arith.addf %7, %9 : vector<8x128xf32>
    %c0_6 = arith.constant 0 : index
    %c0_7 = arith.constant 0 : index
    %11 = vector.load %arg4[%c0_6, %c0_7] : memref<8x128xf32, #tpu.memory_space<vmem>>, vector<8x128xf32>
    tpu.vector_store %arg4[%c0_6, %c0_7], %10 {strides = array<i32>} : memref<8x128xf32, #tpu.memory_space<vmem>>, vector<8x128xf32>,
    return
  }
  func.func @transform_0(%arg0: i32, %arg1: i32) -> (i32, i32) {
    %c1_i32 = arith.constant 1 : i32
    %0 = arith.muli %arg0, %c1_i32 : i32
    %1 = arith.addi %0, %arg1 : i32
    %c0_i32 = arith.constant 0 : i32
    %2 = arith.minsi %1, %c0_i32 : i32
    %c0_i32_0 = arith.constant 0 : i32
    %c0_i32_1 = arith.constant 0 : i32
    return %2, %c0_i32_0 : i32, i32
  }
  func.func @transform_1(%arg0: i32, %arg1: i32) -> (i32, i32) {
    %c1_i32 = arith.constant 1 : i32
    %0 = arith.muli %arg0, %c1_i32 : i32
    %1 = arith.addi %0, %arg1 : i32
    %c0_i32 = arith.constant 0 : i32
    %2 = arith.minsi %1, %c0_i32 : i32
    %c0_i32_0 = arith.constant 0 : i32
    %c0_i32_1 = arith.constant 0 : i32
    return %2, %c0_i32_0 : i32, i32
  }
  func.func @transform_2(%arg0: i32, %arg1: i32) -> (i32, i32) {
    %c0_i32 = arith.constant 0 : i32
    %c0_i32_0 = arith.constant 0 : i32
    return %arg0, %c0_i32 : i32, i32
  }
}

</mosaic_0001>

<llo_original>
// kernel: tpu_custom_call.1
$region0: #{tpu_custom_call.1}
  #allocation0 [shape = 'u32[]', space=smem, size = 0x4, offset = 0x4, fixed_abs, tag = 'smem constant byte address 0x4 - core index']
  #allocation1 [shape = 'u32[144,128]{1,0:T(1,128)}', space=vmem, size = 0x12000, scoped, tag = 'internal scratch']
  %s0 = inlined_call_operand.hbm [shape: f32[16,128], index: 0, kind: input, shape index: {}]
  %s1 = inlined_call_operand.hbm [shape: f32[16,128], index: 1, kind: input, shape index: {}]
  %s2 = inlined_call_operand.hbm [shape: f32[8,128], index: 2, kind: output, shape index: {}]
  %s3 = sld [smem:[#allocation0]]
  $region30: #{tpu_custom_call.1} parent=0
    _
  %s5 = ssub.s32 1, %s3
  %s6 = scalar_select 0, %s5, %s3
  $region1: #{tpu_custom_call.1} parent=0
    #allocation2 [shape = 'u8[8192]{0}', space=vmem, size = 0x2000, scoped, tag = 'input window, operand 0, single buffered']
    #allocation3 [shape = 's32[1]{0}', space=sflag, size = 0x4, scoped, tag = 'scoped memory for tpu_custom_call.1']
    #allocation4 [shape = 's32[1]{0}', space=sflag, size = 0x4, scoped, tag = 'scoped memory for tpu_custom_call.1']
    #allocation5 [shape = 'u8[8192]{0}', space=vmem, size = 0x2000, scoped, tag = 'input window, operand 1, single buffered']
    #allocation6 [shape = 's32[1]{0}', space=sflag, size = 0x4, scoped, tag = 'scoped memory for tpu_custom_call.1']
    #allocation7 [shape = 'u8[4096]{0}', space=vmem, size = 0x1000, scoped, tag = 'output window, operand 0, single buffered']
    %7 = vsyncpa [#allocation3], 0
    %8 = vsyncpa [#allocation6], 0
    %9 = vsyncpa [#allocation4], 0
    // Predicated region
    $region2: #{tpu_custom_call.1} parent=1 // pred_check
      _
    $region3: #{tpu_custom_call.1} parent=1 // pred_check_branch
      %11 = sbr.rel (0) target = $region5
    $region4: #{tpu_custom_call.1} parent=1 // pred_region
      %s12 = sadd.s32 0, 0
      %p13 = scmp.lt.s32.totalorder %s12, 0
      %s14 = scalar_select %p13, %s12, 0
      %s15 = smul.u32 2, %s14
      %s17 = ssub.s32 256, 256
      %18 = vsyncadd [#allocation3], %s17
      %s19 = smul.addr %s15, 128
      %s20 = scalar_lea.hbm %s0, %s19
      %s21 = sshll.u32 [#allocation2], 4
      %s22 = int_to_ptr.vmem [resolvable:$true] %s21
      %27 = dma.hbm_to_vmem [thread:$0]  %s20, 256, %s22, [#allocation3], 128, 128, 8
    $region5: #{tpu_custom_call.1} parent=1 // pred_fallthru
      _
    // Predicated region
    $region6: #{tpu_custom_call.1} parent=1 // pred_check
      _
    $region7: #{tpu_custom_call.1} parent=1 // pred_check_branch
      %29 = sbr.rel (0) target = $region9
    $region8: #{tpu_custom_call.1} parent=1 // pred_region
      %s30 = sadd.s32 0, 0
      %p31 = scmp.lt.s32.totalorder %s30, 0
      %s32 = scalar_select %p31, %s30, 0
      %s33 = smul.u32 2, %s32
      %s35 = ssub.s32 256, 256
      %36 = vsyncadd [#allocation6], %s35
      %s37 = smul.addr %s33, 128
      %s38 = scalar_lea.hbm %s1, %s37
      %s39 = sshll.u32 [#allocation5], 4
      %s40 = int_to_ptr.vmem [resolvable:$true] %s39
      %45 = dma.hbm_to_vmem [thread:$0]  %s38, 256, %s40, [#allocation6], 128, 128, 8
    $region9: #{tpu_custom_call.1} parent=1 // pred_fallthru
      _
    // Predicated region
    $region10: #{tpu_custom_call.1} parent=1 // pred_check
      _
    $region11: #{tpu_custom_call.1} parent=1 // pred_check_branch
      %47 = sbr.rel (0) target = $region13
    $region12: #{tpu_custom_call.1} parent=1 // pred_region
      %48 = dma.done [#allocation3], 256
    $region13: #{tpu_custom_call.1} parent=1 // pred_fallthru
      _
    // Predicated region
    $region14: #{tpu_custom_call.1} parent=1 // pred_check
      _
    $region15: #{tpu_custom_call.1} parent=1 // pred_check_branch
      %50 = sbr.rel (0) target = $region17
    $region16: #{tpu_custom_call.1} parent=1 // pred_region
      %51 = dma.done [#allocation6], 256
    $region17: #{tpu_custom_call.1} parent=1 // pred_fallthru
      _
    %s52 = sadd.s32 0, 0
    %p53 = scmp.lt.s32.totalorder %s52, 0
    %s54 = scalar_select %p53, %s52, 0
    %s55 = smul.u32 2, %s54
    %s56 = sadd.s32 0, 0
    %p57 = scmp.lt.s32.totalorder %s56, 0
    %s58 = scalar_select %p57, %s56, 0
    %s59 = smul.u32 2, %s58
    %p60 = scmp.eq.s32.totalorder 0, 0
    // Predicated region
    $region18: #{tpu_custom_call.1} parent=1 // pred_check
      %p61 = pneg %p60
    $region19: #{tpu_custom_call.1} parent=1 // pred_check_branch
      %63 = sbr.rel (%p61) target = $region21
    $region20: #{tpu_custom_call.1} parent=1 // pred_region
      %64 = vst [vmem:[#allocation7] sm:$0xff] 0.0
    $region21: #{tpu_custom_call.1} parent=1 // pred_fallthru
      _
    %v65 = vld [vmem:[#allocation2] sm:$0xff]
    %v66 = vld [vmem:[#allocation2 + $0x8] sm:$0xff]
    %v67 = vld [vmem:[#allocation5] sm:$0xff]
    %v68 = vld [vmem:[#allocation5 + $0x8] sm:$0xff]
    %v69 = vsub.f32 %v65, %v67
    %v70 = vsub.f32 %v66, %v68
    %v71 = vand.u32 2147483647, %v69
    %v72 = vand.u32 2147483647, %v70
    %v73 = vld [vmem:[#allocation7] sm:$0xff]
    %v74 = vadd.f32 %v71, %v72
    %v75 = vadd.f32 %v73, %v74
    %76 = vst [vmem:[#allocation7] sm:$0xff] %v75
    // Predicated region
    $region22: #{tpu_custom_call.1} parent=1 // pred_check
      _
    $region23: #{tpu_custom_call.1} parent=1 // pred_check_branch
      %78 = sbr.rel (0) target = $region25
    $region24: #{tpu_custom_call.1} parent=1 // pred_region
      %s80 = ssub.s32 128, 128
      %81 = vsyncadd [#allocation4], %s80
      %s83 = sshll.u32 [#allocation7], 4
      %s84 = int_to_ptr.vmem [resolvable:$true] %s83
      %86 = dma.vmem_to_hbm [thread:$0]  %s84, 128, %s2, [#allocation4]
    $region25: #{tpu_custom_call.1} parent=1 // pred_fallthru
      _
    // Predicated region
    $region26: #{tpu_custom_call.1} parent=1 // pred_check
      _
    $region27: #{tpu_custom_call.1} parent=1 // pred_check_branch
      %88 = sbr.rel (0) target = $region29
    $region28: #{tpu_custom_call.1} parent=1 // pred_region
      %89 = dma.done [#allocation4], 128
    $region29: #{tpu_custom_call.1} parent=1 // pred_fallthru
      _
    %90 = vsyncpa [#allocation3], 1
    %91 = vsyncpa [#allocation6], 1
    %92 = vsyncpa [#allocation4], 1

</llo_original>
